<compile_context>
chip_gen: v6e
topology: v6e:2x2x1
jax: 0.10.0
libtpu: 0.0.40
codegen_flags: <defaults>
</compile_context>

<pallas_src>
import functools

import jax
import jax.numpy as jnp
from jax.experimental import pallas as pl
from jax.experimental.pallas import tpu as pltpu


def _fake_quant_kernel(x_ref, inv_s_ref, s_ref, zp_ref, o_ref, *,
                       quant_min, quant_max):
    x = x_ref[...]                              # (rb, cb) f32
    inv_s = inv_s_ref[...]                      # (rb, 1)  f32
    s = s_ref[...]                              # (rb, 1)  f32
    zp = zp_ref[...]                            # (rb, 1)  f32 (pre-cast)
    q = jnp.clip(jnp.round(x * inv_s + zp),
                 float(quant_min), float(quant_max))
    o_ref[...] = (q - zp) * s


def _pick_blocks(rows, cols, *, target_bytes=2 * 1024 * 1024, itemsize=4,
                 max_cols=4096, max_rows=4096):
    """Pick a (rb, cb) tile: lane-dense, (8,128)-legal, ~target_bytes big."""
    # Lane dim: full extent if modest (always legal), else a multiple of 128.
    if cols <= max_cols:
        cb = cols
    else:
        cb = (max_cols // 128) * 128
    # Sublane dim from the byte budget (multiple of 8, or full extent).
    rb_budget = max(8, target_bytes // max(cb * itemsize, 1))
    rb_budget = min(rb_budget, max_rows)
    if rows <= rb_budget:
        rb = rows
    else:
        rb = max(8, (rb_budget // 8) * 8)
    return rb, cb


def fixed_fake_quantize(x, scale, zero_point, quant_min, quant_max,
                        ch_axis=1, fake_quant_enabled=True):
    """Pallas port of FixedFakeQuantize.forward.

    x:           float tensor, channel dim at `ch_axis` (e.g. NCHW, ch_axis=1)
    scale:       (C,) f32 for per-channel, or (1,) for per-tensor
    zero_point:  (C,) int for per-channel, or (1,) for per-tensor
    """
    if not fake_quant_enabled:
        return x                                  # identity pass-through

    x = jnp.asarray(x, jnp.float32)
    scale = jnp.asarray(scale, jnp.float32)
    zero_point = jnp.asarray(zero_point)

    shape = x.shape
    C = shape[ch_axis]
    outer = 1
    for d in shape[:ch_axis]:
        outer *= d
    inner = 1
    for d in shape[ch_axis + 1:]:
        inner *= d
    rows, cols = outer * C, inner

    is_per_channel = scale.shape[0] > 1
    if not is_per_channel:
        # per-tensor: broadcast the single qparam across channels (same math)
        scale = jnp.broadcast_to(scale.reshape(1), (C,))
        zero_point = jnp.broadcast_to(zero_point.reshape(1), (C,))

    # Per-row qparams: a few KB, built once in the wrapper (no per-tile work).
    inv_scale = 1.0 / scale
    s_rows = jnp.tile(scale, outer).reshape(rows, 1).astype(jnp.float32)
    inv_rows = jnp.tile(inv_scale, outer).reshape(rows, 1).astype(jnp.float32)
    zp_rows = jnp.tile(zero_point.astype(jnp.float32), outer).reshape(rows, 1)

    # Free view of the contiguous layout: (outer*C, inner) -- no transpose.
    x2d = x.reshape(rows, cols)

    rb, cb = _pick_blocks(rows, cols)
    grid = (pl.cdiv(rows, rb), pl.cdiv(cols, cb))

    kernel = functools.partial(_fake_quant_kernel,
                               quant_min=quant_min, quant_max=quant_max)

    out2d = pl.pallas_call(
        kernel,
        out_shape=jax.ShapeDtypeStruct((rows, cols), jnp.float32),
        grid_spec=pltpu.PrefetchScalarGridSpec(
            num_scalar_prefetch=0,
            grid=grid,
            in_specs=[
                pl.BlockSpec((rb, cb), lambda i, j: (i, j)),
                pl.BlockSpec((rb, 1), lambda i, j: (i, 0)),
                pl.BlockSpec((rb, 1), lambda i, j: (i, 0)),
                pl.BlockSpec((rb, 1), lambda i, j: (i, 0)),
            ],
            out_specs=pl.BlockSpec((rb, cb), lambda i, j: (i, j)),
        ),
        compiler_params=pltpu.CompilerParams(
            dimension_semantics=("parallel", "parallel")),
    )(x2d, inv_rows, s_rows, zp_rows)

    return out2d.reshape(shape)

    # TODO(synk): if `inner` (product of dims after ch_axis) is << 128 the
    # lane dim is narrow and stores are partially masked; a channel-aware
    # re-factorization of the lane dim would help that edge case.


def _reference(x, scale, zero_point, quant_min, quant_max, ch_axis=1):
    """Plain-JAX reference (matches torch's x * inv_scale formulation)."""
    x = jnp.asarray(x, jnp.float32)
    C = x.shape[ch_axis]
    if scale.shape[0] == 1:
        scale = jnp.broadcast_to(scale, (C,))
        zero_point = jnp.broadcast_to(zero_point, (C,))
    bshape = [1] * x.ndim
    bshape[ch_axis] = C
    s = scale.reshape(bshape).astype(jnp.float32)
    zp = zero_point.astype(jnp.float32).reshape(bshape)
    q = jnp.clip(jnp.round(x * (1.0 / s) + zp), quant_min, quant_max)
    return (q - zp) * s


if __name__ == "__main__":
    key = jax.random.PRNGKey(0)
    k0, k1 = jax.random.split(key)

    quant_min, quant_max = -128, 127

    # ---- main test: NCHW, per-channel qparams, ch_axis=1 ----
    N, C, H, W = 2, 4, 16, 16
    x = jax.random.normal(k0, (N, C, H, W), dtype=jnp.float32) * 3.0
    scale = jnp.array([0.05, 0.1, 0.02, 0.08], dtype=jnp.float32)        # (C,)
    zero_point = jnp.array([0, 3, -5, 10], dtype=jnp.int32)              # (C,)

    out = fixed_fake_quantize(x, scale, zero_point, quant_min, quant_max,
                              ch_axis=1)
    out = jax.block_until_ready(out)
    ref = _reference(x, scale, zero_point, quant_min, quant_max, ch_axis=1)
    assert out.shape == x.shape and out.dtype == x.dtype
    assert jnp.allclose(out, ref, atol=1e-6), "per-channel mismatch"

    # ---- per-tensor path (scale.size(0) == 1) ----
    out_pt = fixed_fake_quantize(x, jnp.array([0.07], jnp.float32),
                                 jnp.array([2], jnp.int32),
                                 quant_min, quant_max, ch_axis=1)
    out_pt = jax.block_until_ready(out_pt)
    ref_pt = _reference(x, jnp.array([0.07], jnp.float32),
                        jnp.array([2], jnp.int32),
                        quant_min, quant_max, ch_axis=1)
    assert jnp.allclose(out_pt, ref_pt, atol=1e-6), "per-tensor mismatch"

    # ---- ragged shape: non-multiple-of-8 rows, non-multiple-of-128 lanes ----
    x2 = jax.random.normal(k1, (2, 3, 40, 40), dtype=jnp.float32) * 2.0
    s2 = jnp.array([0.03, 0.09, 0.015], dtype=jnp.float32)
    zp2 = jnp.array([1, -7, 4], dtype=jnp.int32)
    out2 = fixed_fake_quantize(x2, s2, zp2, quant_min, quant_max, ch_axis=1)
    out2 = jax.block_until_ready(out2)
    ref2 = _reference(x2, s2, zp2, quant_min, quant_max, ch_axis=1)
    assert jnp.allclose(out2, ref2, atol=1e-6), "ragged-shape mismatch"

    # ---- ch_axis=0 (module default) ----
    x3 = jax.random.normal(k0, (4, 2, 16, 16), dtype=jnp.float32)
    out3 = fixed_fake_quantize(x3, scale, zero_point, quant_min, quant_max,
                               ch_axis=0)
    out3 = jax.block_until_ready(out3)
    ref3 = _reference(x3, scale, zero_point, quant_min, quant_max, ch_axis=0)
    assert jnp.allclose(out3, ref3, atol=1e-6), "ch_axis=0 mismatch"

    # ---- fake_quant_enabled=False is identity (no kernel launched) ----
    out_id = fixed_fake_quantize(x, scale, zero_point, quant_min, quant_max,
                                 ch_axis=1, fake_quant_enabled=False)
    assert out_id is x, "disabled path must be identity"

    # TODO(synk): calculate_qparams / enable_fake_quant / disable_fake_quant
    # are host-side state management, not kernels.
    print("KERNEL_OK")
</pallas_src>

<mosaic_0001>
module attributes {stable_mosaic.version = 11 : i64} {
  func.func @_fake_quant_kernel(%arg0: i32, %arg1: i32, %arg2: memref<8x256xf32, #tpu.memory_space<vmem>>, %arg3: memref<8x1xf32, #tpu.memory_space<vmem>>, %arg4: memref<8x1xf32, #tpu.memory_space<vmem>>, %arg5: memref<8x1xf32, #tpu.memory_space<vmem>>, %arg6: memref<8x256xf32, #tpu.memory_space<vmem>>) attributes {dimension_semantics = [#tpu.dimension_semantics<parallel>, #tpu.dimension_semantics<parallel>], iteration_bounds = array<i64: 1, 1>, scalar_prefetch = 0 : i64, scratch_operands = 0 : i64, tpu.core_type = #tpu.core_type<tc>, window_params = [{transform_indices = @transform_0, window_bounds = array<i64: 8, 256>}, {transform_indices = @transform_1, window_bounds = array<i64: 8, 1>}, {transform_indices = @transform_2, window_bounds = array<i64: 8, 1>}, {transform_indices = @transform_3, window_bounds = array<i64: 8, 1>}, {transform_indices = @transform_4, window_bounds = array<i64: 8, 256>}]} {
    %c0 = arith.constant 0 : index
    %c0_0 = arith.constant 0 : index
    %0 = vector.load %arg2[%c0, %c0_0] : memref<8x256xf32, #tpu.memory_space<vmem>>, vector<8x256xf32>
    %c0_1 = arith.constant 0 : index
    %c0_2 = arith.constant 0 : index
    %1 = vector.load %arg3[%c0_1, %c0_2] : memref<8x1xf32, #tpu.memory_space<vmem>>, vector<8x1xf32>
    %c0_3 = arith.constant 0 : index
    %c0_4 = arith.constant 0 : index
    %2 = vector.load %arg4[%c0_3, %c0_4] : memref<8x1xf32, #tpu.memory_space<vmem>>, vector<8x1xf32>
    %c0_5 = arith.constant 0 : index
    %c0_6 = arith.constant 0 : index
    %3 = vector.load %arg5[%c0_5, %c0_6] : memref<8x1xf32, #tpu.memory_space<vmem>>, vector<8x1xf32>
    %4 = vector.broadcast %1 : vector<8x1xf32> to vector<8x256xf32>
    %5 = arith.mulf %0, %4 : vector<8x256xf32>
    %6 = vector.broadcast %3 : vector<8x1xf32> to vector<8x256xf32>
    %7 = arith.addf %5, %6 : vector<8x256xf32>
    %8 = math.roundeven %7 : vector<8x256xf32>
    %cst = arith.constant -1.280000e+02 : f32
    %cst_7 = arith.constant 1.270000e+02 : f32
    %9 = vector.broadcast %cst : f32 to vector<8x256xf32>
    %10 = arith.maximumf %9, %8 : vector<8x256xf32>
    %11 = vector.broadcast %cst_7 : f32 to vector<8x256xf32>
    %12 = arith.minimumf %11, %10 : vector<8x256xf32>
    %13 = vector.broadcast %3 : vector<8x1xf32> to vector<8x256xf32>
    %14 = arith.subf %12, %13 : vector<8x256xf32>
    %15 = vector.broadcast %2 : vector<8x1xf32> to vector<8x256xf32>
    %16 = arith.mulf %14, %15 : vector<8x256xf32>
    %c0_8 = arith.constant 0 : index
    %c0_9 = arith.constant 0 : index
    %17 = vector.load %arg6[%c0_8, %c0_9] : memref<8x256xf32, #tpu.memory_space<vmem>>, vector<8x256xf32>
    tpu.vector_store %arg6[%c0_8, %c0_9], %16 {strides = array<i32>} : memref<8x256xf32, #tpu.memory_space<vmem>>, vector<8x256xf32>,
    return
  }
  func.func @transform_0(%arg0: i32, %arg1: i32) -> (i32, i32) {
    %c0_i32 = arith.constant 0 : i32
    return %arg0, %arg1 : i32, i32
  }
  func.func @transform_1(%arg0: i32, %arg1: i32) -> (i32, i32) {
    %c0_i32 = arith.constant 0 : i32
    %c0_i32_0 = arith.constant 0 : i32
    return %arg0, %c0_i32 : i32, i32
  }
  func.func @transform_2(%arg0: i32, %arg1: i32) -> (i32, i32) {
    %c0_i32 = arith.constant 0 : i32
    %c0_i32_0 = arith.constant 0 : i32
    return %arg0, %c0_i32 : i32, i32
  }
  func.func @transform_3(%arg0: i32, %arg1: i32) -> (i32, i32) {
    %c0_i32 = arith.constant 0 : i32
    %c0_i32_0 = arith.constant 0 : i32
    return %arg0, %c0_i32 : i32, i32
  }
  func.func @transform_4(%arg0: i32, %arg1: i32) -> (i32, i32) {
    %c0_i32 = arith.constant 0 : i32
    return %arg0, %arg1 : i32, i32
  }
}

</mosaic_0001>

<llo_original>
// kernel: tpu_custom_call.1
$region0: #{tpu_custom_call.1}
  #allocation0 [shape = 'u32[]', space=smem, size = 0x4, offset = 0x4, fixed_abs, tag = 'smem constant byte address 0x4 - core index']
  #allocation1 [shape = 'u32[144,128]{1,0:T(1,128)}', space=vmem, size = 0x12000, scoped, tag = 'internal scratch']
  %s0 = inlined_call_operand.vmem [shape: f32[8,256], index: 0, kind: input, shape index: {}]
  %s1 = inlined_call_operand.vmem [shape: f32[8,1], index: 1, kind: input, shape index: {}]
  %s2 = inlined_call_operand.vmem [shape: f32[8,1], index: 2, kind: input, shape index: {}]
  %s3 = inlined_call_operand.vmem [shape: f32[8,1], index: 3, kind: input, shape index: {}]
  %s4 = inlined_call_operand.hbm [shape: f32[8,256], index: 4, kind: output, shape index: {}]
  %s5 = sld [smem:[#allocation0]]
  $region26: #{tpu_custom_call.1} parent=0
    _
  %s7 = ssub.s32 1, %s5
  %s8 = scalar_select 0, %s7, %s5
  $region1: #{tpu_custom_call.1} parent=0
    #allocation2 [shape = 'u8[8192]{0}', space=vmem, size = 0x2000, scoped, tag = 'output window, operand 0, single buffered']
    #allocation3 [shape = 's32[1]{0}', space=sflag, size = 0x4, scoped, tag = 'scoped memory for tpu_custom_call.1']
    %9 = vsyncpa [#allocation3], 0
    // Predicated region
    $region2: #{tpu_custom_call.1} parent=1 // pred_check
      _
    $region3: #{tpu_custom_call.1} parent=1 // pred_check_branch
      %11 = sbr.rel (0) target = $region5
    $region4: #{tpu_custom_call.1} parent=1 // pred_region
      _
    $region5: #{tpu_custom_call.1} parent=1 // pred_fallthru
      _
    // Predicated region
    $region6: #{tpu_custom_call.1} parent=1 // pred_check
      _
    $region7: #{tpu_custom_call.1} parent=1 // pred_check_branch
      %13 = sbr.rel (0) target = $region9
    $region8: #{tpu_custom_call.1} parent=1 // pred_region
      _
    $region9: #{tpu_custom_call.1} parent=1 // pred_fallthru
      _
    // Predicated region
    $region10: #{tpu_custom_call.1} parent=1 // pred_check
      _
    $region11: #{tpu_custom_call.1} parent=1 // pred_check_branch
      %15 = sbr.rel (0) target = $region13
    $region12: #{tpu_custom_call.1} parent=1 // pred_region
      _
    $region13: #{tpu_custom_call.1} parent=1 // pred_fallthru
      _
    // Predicated region
    $region14: #{tpu_custom_call.1} parent=1 // pred_check
      _
    $region15: #{tpu_custom_call.1} parent=1 // pred_check_branch
      %17 = sbr.rel (0) target = $region17
    $region16: #{tpu_custom_call.1} parent=1 // pred_region
      _
    $region17: #{tpu_custom_call.1} parent=1 // pred_fallthru
      _
    %v18 = vld [vmem:[%s0] sm:$0xff]
    %v19 = vld [vmem:[%s0 + $0x8] sm:$0xff]
    %v20 = vld [vmem:[%s1] sm:$0xff]
    %v21 = vld [vmem:[%s2] sm:$0xff]
    %v22 = vld [vmem:[%s3] sm:$0xff]
    %24 = vset.pattern.permute.xlu0 0
    %25 = vperm.xlu0 %24, %v20
    %v26 = vpop.permute.xlu0 %25
    %v28 = vmul.f32 %v18, %v26
    %v29 = vmul.f32 %v19, %v26
    %31 = vset.pattern.permute.xlu0 0
    %32 = vperm.xlu0 %31, %v22
    %v33 = vpop.permute.xlu0 %32
    %v35 = vadd.f32 %v28, %v33
    %v36 = vadd.f32 %v29, %v33
    %v37 = vround.ne.pseudo %v35
    %v38 = vround.ne.pseudo %v36
    %v39 = vmax.f32 %v37, -128.0
    %v40 = vmax.f32 %v38, -128.0
    %v41 = vmin.f32 %v39, 127.0
    %v42 = vmin.f32 %v40, 127.0
    %v43 = vsub.f32 %v41, %v33
    %v44 = vsub.f32 %v42, %v33
    %46 = vset.pattern.permute.xlu0 0
    %47 = vperm.xlu0 %46, %v21
    %v48 = vpop.permute.xlu0 %47
    %v50 = vmul.f32 %v43, %v48
    %v51 = vmul.f32 %v44, %v48
    %52 = vst [vmem:[#allocation2] sm:$0xff] %v50
    %53 = vst [vmem:[#allocation2 + $0x8] sm:$0xff] %v51
    // Predicated region
    $region18: #{tpu_custom_call.1} parent=1 // pred_check
      _
    $region19: #{tpu_custom_call.1} parent=1 // pred_check_branch
      %55 = sbr.rel (0) target = $region21
    $region20: #{tpu_custom_call.1} parent=1 // pred_region
      %s57 = ssub.s32 256, 256
      %58 = vsyncadd [#allocation3], %s57
      %s60 = sshll.u32 [#allocation2], 4
      %s61 = int_to_ptr.vmem [resolvable:$true] %s60
      %63 = dma.vmem_to_hbm [thread:$0]  %s61, 256, %s4, [#allocation3]
    $region21: #{tpu_custom_call.1} parent=1 // pred_fallthru
      _
    // Predicated region
    $region22: #{tpu_custom_call.1} parent=1 // pred_check
      _
    $region23: #{tpu_custom_call.1} parent=1 // pred_check_branch
      %65 = sbr.rel (0) target = $region25
    $region24: #{tpu_custom_call.1} parent=1 // pred_region
      %66 = dma.done [#allocation3], 256
    $region25: #{tpu_custom_call.1} parent=1 // pred_fallthru
      _
    %67 = vsyncpa [#allocation3], 1

</llo_original>
